<compile_context>
chip_gen: v7x
topology: tpu7x:2x2x1
jax: 0.10.0
libtpu: 0.0.40
codegen_flags: <defaults>
</compile_context>

<pallas_src>
import functools

import jax
import jax.numpy as jnp
from jax import lax
from jax.experimental import pallas as pl
from jax.experimental.pallas import tpu as pltpu


_ACTS = {
    "Tanh": jnp.tanh,
    "ReLU": lambda x: jnp.maximum(x, 0.0),
    "Sigmoid": jax.nn.sigmoid,
    "Identity": lambda x: x,
}


def _fp_kernel(a_t_ref, b_ref, z_ref, itr_ref, *, gamma, tol, max_iter,
               activation, matmul_dtype):
    """Fixed-point solve for one block of heads.

    a_t_ref: (HB, N, N) per-head-transposed A (a_t[h, j, i] == A[h, i, j]),
             stored in matmul_dtype.
    b_ref:   (HB, 1, N) f32, nodes on the lane axis.
    z_ref:   (HB, 1, N) f32 output.
    itr_ref: (1, 1, 128) int32 output (iteration count, broadcast over lanes).
    """
    act = _ACTS[activation]

    b = b_ref[...]                                   # (HB, 1, N) f32
    gamma_f = jnp.float32(gamma)
    tol2 = jnp.float32(tol) * jnp.float32(tol)

    def apply_map(x):
        # Batched mat-vec on the MXU.  Contraction dim j is minor for x and
        # second-to-last for A_t, so no relayout inside the loop; A is read
        # straight from its VMEM ref (no full-size temporary).
        ax = jnp.einsum(
            "hrj,hji->hri",
            x.astype(matmul_dtype),
            a_t_ref[...],
            preferred_element_type=jnp.float32,
        )
        # gamma applied to the tiny (HB,1,N) output, not folded into A.
        return act(gamma_f * ax + b)

    x0 = jnp.zeros_like(b)
    x1 = act(b)  # apply_map(0): A @ 0 == 0, so the first mat-vec is free.

    def cond(carry):
        x, x_next, itr = carry
        g = x - x_next
        # Squared Frobenius norm vs tol^2 (sqrt removed from the serial chain).
        # TODO(synk): optionally unroll 2 updates per while step to halve the
        # vector->scalar->branch syncs when the solve is latency bound.
        return jnp.logical_and(itr < max_iter, jnp.sum(g * g) >= tol2)

    def body(carry):
        _, x_next, itr = carry
        return x_next, apply_map(x_next), itr + 1

    # torch break semantics: on convergence return the pre-update x and do not
    # bump itr.  (At max_iter exhaustion one extra apply_map is computed and
    # discarded -- numerically harmless.)
    x_fp, _, frd_itr = lax.while_loop(cond, body, (x0, x1, jnp.int32(0)))

    # Final re-application of the map, as in the torch module forward.
    z_ref[...] = apply_map(x_fp).astype(z_ref.dtype)
    itr_ref[...] = jnp.full(itr_ref.shape, frd_itr, dtype=jnp.int32)


def fixed_point_layer(A, b, *, gamma, activation="Tanh", tol=1e-6, max_iter=50,
                      matmul_dtype=jnp.float32, max_heads_per_block=None):
    """A: [H, N, N], b: [H, N, 1]  ->  (z: [H, N], frd_itr: int32 scalar)."""
    H, N, _ = A.shape
    itemsize = jnp.dtype(matmul_dtype).itemsize

    # Pre-transpose A once (wrapper-side, paid a single time) so the in-kernel
    # contraction needs no per-iteration relayout.  Only place A is cast.
    A_t = jnp.swapaxes(A, 1, 2).astype(matmul_dtype)       # (H, N, N)
    b32 = b.astype(jnp.float32).reshape(H, 1, N)           # nodes on lanes

    # ---- VMEM budgeting (per TensorCore) ------------------------------------
    try:
        vmem_cap = int(pltpu.get_tpu_info().vmem_capacity_bytes)
    except Exception:
        vmem_cap = 64 << 20  # conservative: v7x per-TC VMEM
    budget = max(vmem_cap - (8 << 20), 16 << 20)

    def footprint(hb):
        a_blk = 2 * hb * N * N * itemsize          # double-buffered A block
        vecs = 16 * hb * max(N, 128) * 4           # b/z/x/x_next/g (+ padding slack)
        return a_blk + vecs + (2 << 20)            # Mosaic scratch slack

    hb = H if max_heads_per_block is None else max(1, min(int(max_heads_per_block), H))
    while hb > 1 and (H % hb != 0 or footprint(hb) > budget):
        hb -= 1
    if footprint(hb) > budget:
        # TODO(synk): tile the node dimension as well (blocked mat-vec with a
        # cross-tile norm reduction) when a single head's A does not fit VMEM.
        raise NotImplementedError(
            f"single-head A block ({N}x{N} {jnp.dtype(matmul_dtype).name}) "
            f"exceeds the VMEM budget ({budget} bytes)")
    num_blocks = H // hb

    vmem_limit = int(min(vmem_cap - (4 << 20),
                         max(footprint(hb) + (4 << 20), 32 << 20)))

    kernel = functools.partial(
        _fp_kernel, gamma=gamma, tol=tol, max_iter=max_iter,
        activation=activation, matmul_dtype=matmul_dtype)

    # NOTE: with num_blocks > 1 the stopping test is per head block (each block
    # still converges to tol) instead of torch's single global norm; frd_itr is
    # reported as the max over blocks.  With num_blocks == 1 it is exact.
    # TODO(synk): for very large A with few solver iterations, overlap the
    # first head-block's HBM->VMEM load with its first iteration (manual DMA).
    z3, itr = pl.pallas_call(
        kernel,
        out_shape=(
            jax.ShapeDtypeStruct((H, 1, N), jnp.float32),
            jax.ShapeDtypeStruct((num_blocks, 1, 128), jnp.int32),
        ),
        grid=(num_blocks,),
        in_specs=[
            pl.BlockSpec((hb, N, N), lambda g: (g, 0, 0)),
            pl.BlockSpec((hb, 1, N), lambda g: (g, 0, 0)),
        ],
        out_specs=(
            pl.BlockSpec((hb, 1, N), lambda g: (g, 0, 0)),
            pl.BlockSpec((1, 1, 128), lambda g: (g, 0, 0)),
        ),
        compiler_params=pltpu.CompilerParams(
            dimension_semantics=("parallel",),   # v7x: head blocks on both TCs
            vmem_limit_bytes=vmem_limit,
        ),
    )(A_t, b32)

    # TODO(synk): the torch backward hook (implicit-function-theorem gradient
    # via a second fixed-point solve on J) and the A_max bookkeeping attribute
    # are autograd/side-effect machinery, not part of the forward output.
    return z3.reshape(H, N), jnp.max(itr[:, 0, 0])


def _reference(A, b, *, gamma, activation, tol, max_iter):
    """Pure-JAX mirror of the torch forward for a sanity check."""
    act = _ACTS[activation]
    H, N, _ = A.shape
    b2 = b.reshape(H, N)

    def apply_map(x):
        return act(gamma * jnp.einsum("hij,hj->hi", A, x) + b2)

    x = jnp.zeros_like(b2)
    itr = 0
    for _ in range(max_iter):
        x_next = apply_map(x)
        if float(jnp.linalg.norm(x - x_next)) < tol:
            break
        x = x_next
        itr += 1
    return apply_map(x), itr


if __name__ == "__main__":
    H, N = 4, 16          # heads, nodes
    gamma = 0.5
    activation = "Tanh"
    tol, max_iter = 1e-6, 50

    key = jax.random.PRNGKey(0)
    kA, kb = jax.random.split(key)
    # Scale A so gamma * ||A|| < 1 (contraction -> fixed point exists).
    A = 0.1 * jax.random.normal(kA, (H, N, N), dtype=jnp.float32)
    b = jax.random.normal(kb, (H, N, 1), dtype=jnp.float32)

    z_ref, itr_ref = _reference(A, b, gamma=gamma, activation=activation,
                                tol=tol, max_iter=max_iter)

    # 1) f32 path, single head block (exact torch global-norm semantics).
    z, frd_itr = fixed_point_layer(A, b, gamma=gamma, activation=activation,
                                   tol=tol, max_iter=max_iter)
    z = jax.block_until_ready(z)
    assert z.shape == (H, N)
    assert jnp.allclose(z, z_ref, atol=1e-5, rtol=1e-5), "f32 mismatch vs reference"
    # MXU vs XLA rounding can land within float noise of tol; allow +-1 iter.
    assert abs(int(frd_itr) - itr_ref) <= 1, f"iters {int(frd_itr)} vs {itr_ref}"
    assert int(frd_itr) < max_iter, "early exit did not trigger"

    # 2) forced head-tiled grid path (2 blocks; per-block convergence).
    z_g, itr_g = fixed_point_layer(A, b, gamma=gamma, activation=activation,
                                   tol=tol, max_iter=max_iter,
                                   max_heads_per_block=2)
    z_g = jax.block_until_ready(z_g)
    assert jnp.allclose(z_g, z_ref, atol=1e-5, rtol=1e-5), "grid-path mismatch"
    assert 0 <= int(itr_g) <= itr_ref + 1, f"grid-path iters {int(itr_g)}"

    # 3) bf16 fast path (half VMEM/DMA, native MXU dtype).  The fixed point
    #    shifts at the bf16-rounding level of A, so use a commensurate tol.
    z_bf, itr_bf = fixed_point_layer(A, b, gamma=gamma, activation=activation,
                                     tol=1e-3, max_iter=max_iter,
                                     matmul_dtype=jnp.bfloat16)
    z_bf = jax.block_until_ready(z_bf)
    assert jnp.allclose(z_bf, z_ref, atol=1e-2), "bf16 path mismatch vs reference"
    assert int(itr_bf) < max_iter, "bf16 early exit did not trigger"

    print("KERNEL_OK")
</pallas_src>

<mosaic_0001>
module attributes {stable_mosaic.version = 11 : i64} {
  func.func @_fp_kernel(%arg0: i32, %arg1: memref<4x16x16xf32, #tpu.memory_space<vmem>>, %arg2: memref<4x1x16xf32, #tpu.memory_space<vmem>>, %arg3: memref<4x1x16xf32, #tpu.memory_space<vmem>>, %arg4: memref<1x1x128xi32, #tpu.memory_space<vmem>>) attributes {dimension_semantics = [#tpu.dimension_semantics<parallel>], iteration_bounds = array<i64: 1>, scalar_prefetch = 0 : i64, scratch_operands = 0 : i64, tpu.core_type = #tpu.core_type<tc>, window_params = [{transform_indices = @transform_0, window_bounds = array<i64: 4, 16, 16>}, {transform_indices = @transform_1, window_bounds = array<i64: 4, 1, 16>}, {transform_indices = @transform_2, window_bounds = array<i64: 4, 1, 16>}, {transform_indices = @transform_3, window_bounds = array<i64: 1, 1, 128>}]} {
    %c0 = arith.constant 0 : index
    %c0_0 = arith.constant 0 : index
    %c0_1 = arith.constant 0 : index
    %0 = vector.load %arg2[%c0, %c0_0, %c0_1] : memref<4x1x16xf32, #tpu.memory_space<vmem>>, vector<4x1x16xf32>
    %cst = arith.constant 9.99999997E-7 : f32
    %cst_2 = arith.constant 9.99999997E-7 : f32
    %1 = arith.mulf %cst, %cst_2 : f32
    %cst_3 = arith.constant 0.000000e+00 : f32
    %2 = vector.broadcast %cst_3 : f32 to vector<4x1x16xf32>
    %3 = math.tanh %0 : vector<4x1x16xf32>
    %cst_4 = arith.constant 5.000000e-01 : f32
    %c0_i32 = arith.constant 0 : i32
    %4:3 = scf.while (%arg5 = %2, %arg6 = %3, %arg7 = %c0_i32) : (vector<4x1x16xf32>, vector<4x1x16xf32>, i32) -> (vector<4x1x16xf32>, vector<4x1x16xf32>, i32) {
      %14 = arith.subf %arg5, %arg6 : vector<4x1x16xf32>
      %c50_i32 = arith.constant 50 : i32
      %15 = arith.cmpi slt, %arg7, %c50_i32 : i32
      %16 = arith.mulf %14, %14 : vector<4x1x16xf32>
      %17 = vector.shape_cast %16 : vector<4x1x16xf32> to vector<1x4x1x16xf32>
      %cst_16 = arith.constant dense<0.000000e+00> : vector<1xf32>
      %18 = vector.multi_reduction <add>, %17, %cst_16 [1, 2, 3] : vector<1x4x1x16xf32> to vector<1xf32>
      %19 = vector.shape_cast %18 : vector<1xf32> to vector<1x1x1x1xf32>
      %20 = vector.extract %19[0, 0, 0, 0] : f32 from vector<1x1x1x1xf32>
      %21 = arith.cmpf oge, %20, %1 : f32
      %22 = arith.andi %15, %21 : i1
      scf.condition(%22) %arg5, %arg6, %arg7 : vector<4x1x16xf32>, vector<4x1x16xf32>, i32
    } do {
    ^bb0(%arg5: vector<4x1x16xf32>, %arg6: vector<4x1x16xf32>, %arg7: i32):
      %c0_16 = arith.constant 0 : index
      %c0_17 = arith.constant 0 : index
      %c0_18 = arith.constant 0 : index
      %14 = vector.load %arg1[%c0_16, %c0_17, %c0_18] : memref<4x16x16xf32, #tpu.memory_space<vmem>>, vector<4x16x16xf32>
      "tpu.trace_start"() <{level = 10 : i32, message = "hrj,hji->hri"}> : () -> ()
      %cst_19 = arith.constant dense<0.000000e+00> : vector<4x1x16xf32>
      %15 = tpu.matmul %arg6, %14, %cst_19 {dimension_numbers = #tpu.dot_dimension_numbers<[2], [1], [1], [2], [0, 0, 0, 1, 1, 2], [0], [0]>} : vector<4x1x16xf32>, vector<4x16x16xf32>, vector<4x1x16xf32> -> vector<4x1x16xf32>
      "tpu.trace_stop"() : () -> ()
      %16 = vector.broadcast %cst_4 : f32 to vector<4x1x16xf32>
      %17 = arith.mulf %16, %15 : vector<4x1x16xf32>
      %18 = arith.addf %17, %0 : vector<4x1x16xf32>
      %19 = math.tanh %18 : vector<4x1x16xf32>
      %c1_i32 = arith.constant 1 : i32
      %20 = arith.addi %arg7, %c1_i32 : i32
      scf.yield %arg6, %19, %20 : vector<4x1x16xf32>, vector<4x1x16xf32>, i32
    }
    %c0_5 = arith.constant 0 : index
    %c0_6 = arith.constant 0 : index
    %c0_7 = arith.constant 0 : index
    %5 = vector.load %arg1[%c0_5, %c0_6, %c0_7] : memref<4x16x16xf32, #tpu.memory_space<vmem>>, vector<4x16x16xf32>
    "tpu.trace_start"() <{level = 10 : i32, message = "hrj,hji->hri"}> : () -> ()
    %cst_8 = arith.constant dense<0.000000e+00> : vector<4x1x16xf32>
    %6 = tpu.matmul %4#0, %5, %cst_8 {dimension_numbers = #tpu.dot_dimension_numbers<[2], [1], [1], [2], [0, 0, 0, 1, 1, 2], [0], [0]>} : vector<4x1x16xf32>, vector<4x16x16xf32>, vector<4x1x16xf32> -> vector<4x1x16xf32>
    "tpu.trace_stop"() : () -> ()
    %cst_9 = arith.constant 5.000000e-01 : f32
    %7 = vector.broadcast %cst_9 : f32 to vector<4x1x16xf32>
    %8 = arith.mulf %7, %6 : vector<4x1x16xf32>
    %9 = arith.addf %8, %0 : vector<4x1x16xf32>
    %10 = math.tanh %9 : vector<4x1x16xf32>
    %c0_10 = arith.constant 0 : index
    %c0_11 = arith.constant 0 : index
    %c0_12 = arith.constant 0 : index
    %11 = vector.load %arg3[%c0_10, %c0_11, %c0_12] : memref<4x1x16xf32, #tpu.memory_space<vmem>>, vector<4x1x16xf32>
    tpu.vector_store %arg3[%c0_10, %c0_11, %c0_12], %10 {strides = array<i32>} : memref<4x1x16xf32, #tpu.memory_space<vmem>>, vector<4x1x16xf32>,
    %12 = vector.broadcast %4#2 : i32 to vector<1x1x128xi32>
    %c0_13 = arith.constant 0 : index
    %c0_14 = arith.constant 0 : index
    %c0_15 = arith.constant 0 : index
    %13 = vector.load %arg4[%c0_13, %c0_14, %c0_15] : memref<1x1x128xi32, #tpu.memory_space<vmem>>, vector<1x1x128xi32>
    tpu.vector_store %arg4[%c0_13, %c0_14, %c0_15], %12 {strides = array<i32>} : memref<1x1x128xi32, #tpu.memory_space<vmem>>, vector<1x1x128xi32>,
    return
  }
  func.func @transform_0(%arg0: i32) -> (i32, i32, i32) {
    %c0_i32 = arith.constant 0 : i32
    %c0_i32_0 = arith.constant 0 : i32
    %c0_i32_1 = arith.constant 0 : i32
    return %arg0, %c0_i32, %c0_i32_0 : i32, i32, i32
  }
  func.func @transform_1(%arg0: i32) -> (i32, i32, i32) {
    %c0_i32 = arith.constant 0 : i32
    %c0_i32_0 = arith.constant 0 : i32
    %c0_i32_1 = arith.constant 0 : i32
    return %arg0, %c0_i32, %c0_i32_0 : i32, i32, i32
  }
  func.func @transform_2(%arg0: i32) -> (i32, i32, i32) {
    %c0_i32 = arith.constant 0 : i32
    %c0_i32_0 = arith.constant 0 : i32
    %c0_i32_1 = arith.constant 0 : i32
    return %arg0, %c0_i32, %c0_i32_0 : i32, i32, i32
  }
  func.func @transform_3(%arg0: i32) -> (i32, i32, i32) {
    %c0_i32 = arith.constant 0 : i32
    %c0_i32_0 = arith.constant 0 : i32
    %c0_i32_1 = arith.constant 0 : i32
    return %arg0, %c0_i32, %c0_i32_0 : i32, i32, i32
  }
}

</mosaic_0001>

<llo_original>
// kernel: tpu_custom_call.1
$region0: #{tpu_custom_call.1}
  #allocation0 [shape = 'u32[]', space=smem, size = 0x4, offset = 0x4, fixed_abs, tag = 'smem constant byte address 0x4 - core index']
  #allocation1 [shape = 'u32[144,128]{1,0:T(1,128)}', space=vmem, size = 0x12000, scoped, tag = 'internal scratch']
  %s0 = inlined_call_operand.hbm [shape: f32[4,16,16], index: 0, kind: input, shape index: {}]
  %s1 = inlined_call_operand.hbm [shape: f32[4,1,16], index: 1, kind: input, shape index: {}]
  %s2 = inlined_call_operand.hbm [shape: f32[4,1,16], index: 2, kind: output, shape index: {0}]
  %s3 = inlined_call_operand.hbm [shape: s32[1,1,128], index: 3, kind: output, shape index: {1}]
  %4 = xla_tuple %s2, %s3
  %s5 = sld [smem:[#allocation0]]
  $region41: #{tpu_custom_call.1} parent=0
    _
  %s7 = ssub.s32 1, %s5
  %s8 = scalar_select 0, %s7, %s5
  $region1: #{tpu_custom_call.1} parent=0
    #allocation2 [shape = 'u8[32768]{0}', space=vmem, size = 0x8000, scoped, tag = 'input window, operand 0, single buffered']
    #allocation3 [shape = 's32[1]{0}', space=sflag, size = 0x4, scoped, tag = 'scoped memory for tpu_custom_call.1']
    #allocation4 [shape = 's32[1]{0}', space=sflag, size = 0x4, scoped, tag = 'scoped memory for tpu_custom_call.1']
    #allocation5 [shape = 'u8[2048]{0}', space=vmem, size = 0x800, scoped, tag = 'input window, operand 1, single buffered']
    #allocation6 [shape = 's32[1]{0}', space=sflag, size = 0x4, scoped, tag = 'scoped memory for tpu_custom_call.1']
    #allocation7 [shape = 'u8[2048]{0}', space=vmem, size = 0x800, scoped, tag = 'output window, operand 0, single buffered']
    #allocation8 [shape = 'u8[512]{0}', space=vmem, size = 0x400, scoped, tag = 'output window, operand 1, single buffered']
    #allocation9 [shape = 's32[1]{0}', space=sflag, size = 0x4, scoped, tag = 'scoped memory for tpu_custom_call.1']
    %9 = vsyncpa [#allocation3], 0
    %10 = vsyncpa [#allocation6], 0
    %11 = vsyncpa [#allocation4], 0
    %12 = vsyncpa [#allocation9], 0
    // Predicated region
    $region2: #{tpu_custom_call.1} parent=1 // pred_check
      _
    $region3: #{tpu_custom_call.1} parent=1 // pred_check_branch
      %14 = sbr.rel (0) target = $region5
    $region4: #{tpu_custom_call.1} parent=1 // pred_region
      %s16 = ssub.s32 1024, 1024
      %17 = vsyncadd [#allocation3], %s16
      %s18 = sshll.u32 [#allocation2], 4
      %s19 = int_to_ptr.vmem [resolvable:$true] %s18
      %24 = dma.hbm_to_vmem [thread:$0]  %s0, 1024, %s19, [#allocation3], 128, 128, 8
    $region5: #{tpu_custom_call.1} parent=1 // pred_fallthru
      _
    // Predicated region
    $region6: #{tpu_custom_call.1} parent=1 // pred_check
      _
    $region7: #{tpu_custom_call.1} parent=1 // pred_check_branch
      %26 = sbr.rel (0) target = $region9
    $region8: #{tpu_custom_call.1} parent=1 // pred_region
      %s28 = ssub.s32 64, 64
      %29 = vsyncadd [#allocation6], %s28
      %s30 = sshll.u32 [#allocation5], 4
      %s31 = int_to_ptr.vmem [resolvable:$true] %s30
      %36 = dma.hbm_to_vmem [thread:$0]  %s1, 64, %s31, [#allocation6], 16, 16, 1
    $region9: #{tpu_custom_call.1} parent=1 // pred_fallthru
      _
    // Predicated region
    $region10: #{tpu_custom_call.1} parent=1 // pred_check
      _
    $region11: #{tpu_custom_call.1} parent=1 // pred_check_branch
      %38 = sbr.rel (0) target = $region13
    $region12: #{tpu_custom_call.1} parent=1 // pred_region
      %39 = dma.done [#allocation3], 1024
    $region13: #{tpu_custom_call.1} parent=1 // pred_fallthru
      _
    // Predicated region
    $region14: #{tpu_custom_call.1} parent=1 // pred_check
      _
    $region15: #{tpu_custom_call.1} parent=1 // pred_check_branch
      %41 = sbr.rel (0) target = $region17
    $region16: #{tpu_custom_call.1} parent=1 // pred_region
      %42 = dma.done [#allocation6], 64
    $region17: #{tpu_custom_call.1} parent=1 // pred_fallthru
      _
    %v43 = vld [vmem:[#allocation5] sm:$0x1]
    %v44 = vld [vmem:[#allocation5 + $0x1] sm:$0x1]
    %v45 = vld [vmem:[#allocation5 + $0x2] sm:$0x1]
    %v46 = vld [vmem:[#allocation5 + $0x3] sm:$0x1]
    %v47 = vtanh.pop %v43
    %v48 = vtanh.pop %v44
    %v49 = vtanh.pop %v45
    %v50 = vtanh.pop %v46
    // While loop
    $region18: #{tpu_custom_call.1} parent=1 // loop_pre_header
      _
    $region19: #{tpu_custom_call.1} parent=1 // loop_header
      %v52 = vphi 0.0, %v56
      %v53 = vphi 0.0, %v57
      %v54 = vphi 0.0, %v58
      %v55 = vphi 0.0, %v59
      %v56 = vphi %v47, %v401
      %v57 = vphi %v48, %v402
      %v58 = vphi %v49, %v403
      %v59 = vphi %v50, %v404
      %s60 = sphi 0, %s405
      %v61 = vsub.f32 %v52, %v56
      %v62 = vsub.f32 %v53, %v57
      %v63 = vsub.f32 %v54, %v58
      %v64 = vsub.f32 %v55, %v59
      %p65 = scmp.lt.s32.totalorder %s60, 50
      %v66 = vmul.f32 %v61, %v61
      %v67 = vmul.f32 %v62, %v62
      %v68 = vmul.f32 %v63, %v63
      %v69 = vmul.f32 %v64, %v64
      %vm70 = vcmask 122880
      %v71 = vsel %vm70, %v66, 0.0
      %v72 = vsel %vm70, %v67, 0.0
      %v73 = vadd.f32 %v71, %v72
      %v74 = vsel %vm70, %v68, 0.0
      %v75 = vadd.f32 %v73, %v74
      %v76 = vsel %vm70, %v69, 0.0
      %v77 = vadd.f32 %v75, %v76
      %78 = vadd.xlane.f32.xlu0 %v77
      %v79 = vpop.xlane.xlu0 %78
      %v80 = vrot.slane %v79, 4
      %v81 = vadd.f32 %v79, %v80
      %v82 = vrot.slane %v81, 2
      %v83 = vadd.f32 %v81, %v82
      %v84 = vrot.slane %v83, 1
      %v85 = vadd.f32 %v83, %v84
      %s86 = vtos %v85
      %p87 = scmp.ge.f32.partialorder %s86, 1e-12
      %p88 = pnand %p65, %p87
      %p89 = pneg %p88
    $region20: #{tpu_custom_call.1} parent=1 // loop_header_branch
      %91 = sbr.rel (%p88) target = $region24
    $region21: #{tpu_custom_call.1} parent=1 // loop_body
      %v92 = vld [vmem:[#allocation2] sm:$0xff]
      %v93 = vld [vmem:[#allocation2 + $0x8] sm:$0xff]
      %v94 = vld [vmem:[#allocation2 + $0x10] sm:$0xff]
      %v95 = vld [vmem:[#allocation2 + $0x18] sm:$0xff]
      %v96 = vld [vmem:[#allocation2 + $0x20] sm:$0xff]
      %v97 = vld [vmem:[#allocation2 + $0x28] sm:$0xff]
      %v98 = vld [vmem:[#allocation2 + $0x30] sm:$0xff]
      %v99 = vld [vmem:[#allocation2 + $0x38] sm:$0xff]
      %vm100 = vcmask 130048
      %v102 = vsel %vm100, %v56, 0
      %104 = vmatprep.subr.mxu0 0.0
      %105 = vmatpush1.msra.mxu0 %v92
      %106 = vmatprep.subr.mxu0 0.0
      %107 = vmatpush1.msra.mxu0 %v93
      %108 = vmatprep.subr.mxu0 0.0
      %109 = vmatpush1.msra.mxu0 0.0
      %110 = vmatprep.subr.mxu0 0.0
      %111 = vmatpush1.msra.mxu0 0.0
      %112 = vmatprep.subr.mxu0 0.0
      %113 = vmatpush1.msra.mxu0 0.0
      %114 = vmatprep.subr.mxu0 0.0
      %115 = vmatpush1.msra.mxu0 0.0
      %116 = vmatprep.subr.mxu0 0.0
      %117 = vmatpush1.msra.mxu0 0.0
      %118 = vmatprep.subr.mxu0 0.0
      %119 = vmatpush1.msra.mxu0 0.0
      %120 = vmatprep.subr.mxu0 0.0
      %121 = vmatpush1.msra.mxu0 0.0
      %122 = vmatprep.subr.mxu0 0.0
      %123 = vmatpush1.msra.mxu0 0.0
      %124 = vmatprep.subr.mxu0 0.0
      %125 = vmatpush1.msra.mxu0 0.0
      %126 = vmatprep.subr.mxu0 0.0
      %127 = vmatpush1.msra.mxu0 0.0
      %128 = vmatprep.subr.mxu0 0.0
      %129 = vmatpush1.msra.mxu0 0.0
      %130 = vmatprep.subr.mxu0 0.0
      %131 = vmatpush1.msra.mxu0 0.0
      %132 = vmatprep.subr.mxu0 0.0
      %133 = vmatpush1.msra.mxu0 0.0
      %134 = vmatprep.subr.mxu0 0.0
      %135 = vmatpush1.msra.mxu0 0.0
      %136 = vmatprep.subr.mxu0 0.0
      %137 = vmatpush1.msra.mxu0 0.0
      %138 = vmatprep.subr.mxu0 0.0
      %139 = vmatpush1.msra.mxu0 0.0
      %140 = vmatprep.subr.mxu0 0.0
      %141 = vmatpush1.msra.mxu0 0.0
      %142 = vmatprep.subr.mxu0 0.0
      %143 = vmatpush1.msra.mxu0 0.0
      %144 = vmatprep.subr.mxu0 0.0
      %145 = vmatpush1.msra.mxu0 0.0
      %146 = vmatprep.subr.mxu0 0.0
      %147 = vmatpush1.msra.mxu0 0.0
      %148 = vmatprep.subr.mxu0 0.0
      %149 = vmatpush1.msra.mxu0 0.0
      %150 = vmatprep.subr.mxu0 0.0
      %151 = vmatpush1.msra.mxu0 0.0
      %152 = vmatprep.subr.mxu0 0.0
      %153 = vmatpush1.msra.mxu0 0.0
      %154 = vmatprep.subr.mxu0 0.0
      %155 = vmatpush1.msra.mxu0 0.0
      %156 = vmatprep.subr.mxu0 0.0
      %157 = vmatpush1.msra.mxu0 0.0
      %158 = vmatprep.subr.mxu0 0.0
      %159 = vmatpush1.msra.mxu0 0.0
      %160 = vmatprep.subr.mxu0 0.0
      %161 = vmatpush1.msra.mxu0 0.0
      %162 = vmatprep.subr.mxu0 0.0
      %163 = vmatpush1.msra.mxu0 0.0
      %164 = vmatprep.subr.mxu0 0.0
      %165 = vmatpush1.msra.mxu0 0.0
      %166 = vmatprep.subr.mxu0 0.0
      %167 = vmatpush1.msra.mxu0 0.0
      %168 = vmatprep.mubr.f32.mxu0 0.0
      %169 = vmatmul.mubr.f32.gmra.mrb[0].mxu0 %v102
      %v170 = vpop.f32.mrb[0].mxu0
      %v171 = vadd.f32 0.0, %v170
      %v172 = vpop.f32.mrb[0].mxu0
      %173 = vdwg.mxu0
      %v175 = vsel %vm100, %v57, 0
      %177 = vmatprep.subr.mxu0 0.0
      %178 = vmatpush1.msra.mxu0 %v94
      %179 = vmatprep.subr.mxu0 0.0
      %180 = vmatpush1.msra.mxu0 %v95
      %181 = vmatprep.subr.mxu0 0.0
      %182 = vmatpush1.msra.mxu0 0.0
      %183 = vmatprep.subr.mxu0 0.0
      %184 = vmatpush1.msra.mxu0 0.0
      %185 = vmatprep.subr.mxu0 0.0
      %186 = vmatpush1.msra.mxu0 0.0
      %187 = vmatprep.subr.mxu0 0.0
      %188 = vmatpush1.msra.mxu0 0.0
      %189 = vmatprep.subr.mxu0 0.0
      %190 = vmatpush1.msra.mxu0 0.0
      %191 = vmatprep.subr.mxu0 0.0
      %192 = vmatpush1.msra.mxu0 0.0
      %193 = vmatprep.subr.mxu0 0.0
      %194 = vmatpush1.msra.mxu0 0.0
      %195 = vmatprep.subr.mxu0 0.0
      %196 = vmatpush1.msra.mxu0 0.0
      %197 = vmatprep.subr.mxu0 0.0
      %198 = vmatpush1.msra.mxu0 0.0
      %199 = vmatprep.subr.mxu0 0.0
      %200 = vmatpush1.msra.mxu0 0.0
      %201 = vmatprep.subr.mxu0 0.0
      %202 = vmatpush1.msra.mxu0 0.0
      %203 = vmatprep.subr.mxu0 0.0
      %204 = vmatpush1.msra.mxu0 0.0
      %205 = vmatprep.subr.mxu0 0.0
      %206 = vmatpush1.msra.mxu0 0.0
      %207 = vmatprep.subr.mxu0 0.0
      %208 = vmatpush1.msra.mxu0 0.0
      %209 = vmatprep.subr.mxu0 0.0
      %210 = vmatpush1.msra.mxu0 0.0
      %211 = vmatprep.subr.mxu0 0.0
      %212 = vmatpush1.msra.mxu0 0.0
      %213 = vmatprep.subr.mxu0 0.0
      %214 = vmatpush1.msra.mxu0 0.0
      %215 = vmatprep.subr.mxu0 0.0
      %216 = vmatpush1.msra.mxu0 0.0
      %217 = vmatprep.subr.mxu0 0.0
      %218 = vmatpush1.msra.mxu0 0.0
      %219 = vmatprep.subr.mxu0 0.0
      %220 = vmatpush1.msra.mxu0 0.0
      %221 = vmatprep.subr.mxu0 0.0
      %222 = vmatpush1.msra.mxu0 0.0
      %223 = vmatprep.subr.mxu0 0.0
      %224 = vmatpush1.msra.mxu0 0.0
      %225 = vmatprep.subr.mxu0 0.0
      %226 = vmatpush1.msra.mxu0 0.0
      %227 = vmatprep.subr.mxu0 0.0
      %228 = vmatpush1.msra.mxu0 0.0
      %229 = vmatprep.subr.mxu0 0.0
      %230 = vmatpush1.msra.mxu0 0.0
      %231 = vmatprep.subr.mxu0 0.0
      %232 = vmatpush1.msra.mxu0 0.0
      %233 = vmatprep.subr.mxu0 0.0
      %234 = vmatpush1.msra.mxu0 0.0
      %235 = vmatprep.subr.mxu0 0.0
      %236 = vmatpush1.msra.mxu0 0.0
      %237 = vmatprep.subr.mxu0 0.0
      %238 = vmatpush1.msra.mxu0 0.0
      %239 = vmatprep.subr.mxu0 0.0
      %240 = vmatpush1.msra.mxu0 0.0
      %241 = vmatprep.mubr.f32.mxu0 0.0
      %242 = vmatmul.mubr.f32.gmra.mrb[0].mxu0 %v175
      %v243 = vpop.f32.mrb[0].mxu0
      %v244 = vadd.f32 0.0, %v243
      %v245 = vpop.f32.mrb[0].mxu0
      %246 = vdwg.mxu0
      %v248 = vsel %vm100, %v58, 0
      %250 = vmatprep.subr.mxu0 0.0
      %251 = vmatpush1.msra.mxu0 %v96
      %252 = vmatprep.subr.mxu0 0.0
      %253 = vmatpush1.msra.mxu0 %v97
      %254 = vmatprep.subr.mxu0 0.0
      %255 = vmatpush1.msra.mxu0 0.0
      %256 = vmatprep.subr.mxu0 0.0
      %257 = vmatpush1.msra.mxu0 0.0
      %258 = vmatprep.subr.mxu0 0.0
      %259 = vmatpush1.msra.mxu0 0.0
      %260 = vmatprep.subr.mxu0 0.0
      %261 = vmatpush1.msra.mxu0 0.0
      %262 = vmatprep.subr.mxu0 0.0
      %263 = vmatpush1.msra.mxu0 0.0
      %264 = vmatprep.subr.mxu0 0.0
      %265 = vmatpush1.msra.mxu0 0.0
      %266 = vmatprep.subr.mxu0 0.0
      %267 = vmatpush1.msra.mxu0 0.0
      %268 = vmatprep.subr.mxu0 0.0
      %269 = vmatpush1.msra.mxu0 0.0
      %270 = vmatprep.subr.mxu0 0.0
      %271 = vmatpush1.msra.mxu0 0.0
      %272 = vmatprep.subr.mxu0 0.0
      %273 = vmatpush1.msra.mxu0 0.0
      %274 = vmatprep.subr.mxu0 0.0
      %275 = vmatpush1.msra.mxu0 0.0
      %276 = vmatprep.subr.mxu0 0.0
      %277 = vmatpush1.msra.mxu0 0.0
      %278 = vmatprep.subr.mxu0 0.0
      %279 = vmatpush1.msra.mxu0 0.0
      %280 = vmatprep.subr.mxu0 0.0
      %281 = vmatpush1.msra.mxu0 0.0
      %282 = vmatprep.subr.mxu0 0.0
      %283 = vmatpush1.msra.mxu0 0.0
      %284 = vmatprep.subr.mxu0 0.0
      %285 = vmatpush1.msra.mxu0 0.0
      %286 = vmatprep.subr.mxu0 0.0
      %287 = vmatpush1.msra.mxu0 0.0
      %288 = vmatprep.subr.mxu0 0.0
      %289 = vmatpush1.msra.mxu0 0.0
      %290 = vmatprep.subr.mxu0 0.0
      %291 = vmatpush1.msra.mxu0 0.0
      %292 = vmatprep.subr.mxu0 0.0
      %293 = vmatpush1.msra.mxu0 0.0
      %294 = vmatprep.subr.mxu0 0.0
      %295 = vmatpush1.msra.mxu0 0.0
      %296 = vmatprep.subr.mxu0 0.0
      %297 = vmatpush1.msra.mxu0 0.0
      %298 = vmatprep.subr.mxu0 0.0
      %299 = vmatpush1.msra.mxu0 0.0
      %300 = vmatprep.subr.mxu0 0.0
      %301 = vmatpush1.msra.mxu0 0.0
      %302 = vmatprep.subr.mxu0 0.0
      %303 = vmatpush1.msra.mxu0 0.0
      %304 = vmatprep.subr.mxu0 0.0
      %305 = vmatpush1.msra.mxu0 0.0
      %306 = vmatprep.subr.mxu0 0.0
      %307 = vmatpush1.msra.mxu0 0.0
      %308 = vmatprep.subr.mxu0 0.0
      %309 = vmatpush1.msra.mxu0 0.0
      %310 = vmatprep.subr.mxu0 0.0
      %311 = vmatpush1.msra.mxu0 0.0
      %312 = vmatprep.subr.mxu0 0.0
      %313 = vmatpush1.msra.mxu0 0.0
      %314 = vmatprep.mubr.f32.mxu0 0.0
      %315 = vmatmul.mubr.f32.gmra.mrb[0].mxu0 %v248
      %v316 = vpop.f32.mrb[0].mxu0
      %v317 = vadd.f32 0.0, %v316
      %v318 = vpop.f32.mrb[0].mxu0
      %319 = vdwg.mxu0
      %v321 = vsel %vm100, %v59, 0
      %323 = vmatprep.subr.mxu0 0.0
      %324 = vmatpush1.msra.mxu0 %v98
      %325 = vmatprep.subr.mxu0 0.0
      %326 = vmatpush1.msra.mxu0 %v99
      %327 = vmatprep.subr.mxu0 0.0
      %328 = vmatpush1.msra.mxu0 0.0
      %329 = vmatprep.subr.mxu0 0.0
      %330 = vmatpush1.msra.mxu0 0.0
      %331 = vmatprep.subr.mxu0 0.0
      %332 = vmatpush1.msra.mxu0 0.0
      %333 = vmatprep.subr.mxu0 0.0
      %334 = vmatpush1.msra.mxu0 0.0
      %335 = vmatprep.subr.mxu0 0.0
      %336 = vmatpush1.msra.mxu0 0.0
      %337 = vmatprep.subr.mxu0 0.0
      %338 = vmatpush1.msra.mxu0 0.0
      %339 = vmatprep.subr.mxu0 0.0
      %340 = vmatpush1.msra.mxu0 0.0
      %341 = vmatprep.subr.mxu0 0.0
      %342 = vmatpush1.msra.mxu0 0.0
      %343 = vmatprep.subr.mxu0 0.0
      %344 = vmatpush1.msra.mxu0 0.0
      %345 = vmatprep.subr.mxu0 0.0
      %346 = vmatpush1.msra.mxu0 0.0
      %347 = vmatprep.subr.mxu0 0.0
      %348 = vmatpush1.msra.mxu0 0.0
      %349 = vmatprep.subr.mxu0 0.0
      %350 = vmatpush1.msra.mxu0 0.0
      %351 = vmatprep.subr.mxu0 0.0
      %352 = vmatpush1.msra.mxu0 0.0
      %353 = vmatprep.subr.mxu0 0.0
      %354 = vmatpush1.msra.mxu0 0.0
      %355 = vmatprep.subr.mxu0 0.0
      %356 = vmatpush1.msra.mxu0 0.0
      %357 = vmatprep.subr.mxu0 0.0
      %358 = vmatpush1.msra.mxu0 0.0
      %359 = vmatprep.subr.mxu0 0.0
      %360 = vmatpush1.msra.mxu0 0.0
      %361 = vmatprep.subr.mxu0 0.0
      %362 = vmatpush1.msra.mxu0 0.0
      %363 = vmatprep.subr.mxu0 0.0
      %364 = vmatpush1.msra.mxu0 0.0
      %365 = vmatprep.subr.mxu0 0.0
      %366 = vmatpush1.msra.mxu0 0.0
      %367 = vmatprep.subr.mxu0 0.0
      %368 = vmatpush1.msra.mxu0 0.0
      %369 = vmatprep.subr.mxu0 0.0
      %370 = vmatpush1.msra.mxu0 0.0
      %371 = vmatprep.subr.mxu0 0.0
      %372 = vmatpush1.msra.mxu0 0.0
      %373 = vmatprep.subr.mxu0 0.0
      %374 = vmatpush1.msra.mxu0 0.0
      %375 = vmatprep.subr.mxu0 0.0
      %376 = vmatpush1.msra.mxu0 0.0
      %377 = vmatprep.subr.mxu0 0.0
      %378 = vmatpush1.msra.mxu0 0.0
      %379 = vmatprep.subr.mxu0 0.0
      %380 = vmatpush1.msra.mxu0 0.0
      %381 = vmatprep.subr.mxu0 0.0
      %382 = vmatpush1.msra.mxu0 0.0
      %383 = vmatprep.subr.mxu0 0.0
      %384 = vmatpush1.msra.mxu0 0.0
      %385 = vmatprep.subr.mxu0 0.0
      %386 = vmatpush1.msra.mxu0 0.0
      %387 = vmatprep.mubr.f32.mxu0 0.0
      %388 = vmatmul.mubr.f32.gmra.mrb[0].mxu0 %v321
      %v389 = vpop.f32.mrb[0].mxu0
      %v390 = vadd.f32 0.0, %v389
      %v391 = vpop.f32.mrb[0].mxu0
      %392 = vdwg.mxu0
      %v393 = vmul.f32 %v171, 0.5
      %v394 = vmul.f32 %v244, 0.5
      %v395 = vmul.f32 %v317, 0.5
      %v396 = vmul.f32 %v390, 0.5
      %v397 = vadd.f32 %v393, %v43
      %v398 = vadd.f32 %v394, %v44
      %v399 = vadd.f32 %v395, %v45
      %v400 = vadd.f32 %v396, %v46
      %v401 = vtanh.pop %v397
      %v402 = vtanh.pop %v398
      %v403 = vtanh.pop %v399
      %v404 = vtanh.pop %v400
      %s405 = sadd.s32 %s60, 1
    $region22: #{tpu_custom_call.1} parent=1 // loop_footer
      _
    $region23: #{tpu_custom_call.1} parent=1 // loop_footer_branch
      %51 = sbr.rel target = $region19
    $region24: #{tpu_custom_call.1} parent=1 // loop_exit
      _
    %v406 = vld [vmem:[#allocation2] sm:$0xff]
    %v407 = vld [vmem:[#allocation2 + $0x8] sm:$0xff]
    %v408 = vld [vmem:[#allocation2 + $0x10] sm:$0xff]
    %v409 = vld [vmem:[#allocation2 + $0x18] sm:$0xff]
    %v410 = vld [vmem:[#allocation2 + $0x20] sm:$0xff]
    %v411 = vld [vmem:[#allocation2 + $0x28] sm:$0xff]
    %v412 = vld [vmem:[#allocation2 + $0x30] sm:$0xff]
    %v413 = vld [vmem:[#allocation2 + $0x38] sm:$0xff]
    %vm414 = vcmask 130048
    %v416 = vsel %vm414, %v52, 0
    %418 = vmatprep.subr.mxu0 0.0
    %419 = vmatpush1.msra.mxu0 %v406
    %420 = vmatprep.subr.mxu0 0.0
    %421 = vmatpush1.msra.mxu0 %v407
    %422 = vmatprep.subr.mxu0 0.0
    %423 = vmatpush1.msra.mxu0 0.0
    %424 = vmatprep.subr.mxu0 0.0
    %425 = vmatpush1.msra.mxu0 0.0
    %426 = vmatprep.subr.mxu0 0.0
    %427 = vmatpush1.msra.mxu0 0.0
    %428 = vmatprep.subr.mxu0 0.0
    %429 = vmatpush1.msra.mxu0 0.0
    %430 = vmatprep.subr.mxu0 0.0
    %431 = vmatpush1.msra.mxu0 0.0
    %432 = vmatprep.subr.mxu0 0.0
    %433 = vmatpush1.msra.mxu0 0.0
    %434 = vmatprep.subr.mxu0 0.0
    %435 = vmatpush1.msra.mxu0 0.0
    %436 = vmatprep.subr.mxu0 0.0
    %437 = vmatpush1.msra.mxu0 0.0
    %438 = vmatprep.subr.mxu0 0.0
    %439 = vmatpush1.msra.mxu0 0.0
    %440 = vmatprep.subr.mxu0 0.0
    %441 = vmatpush1.msra.mxu0 0.0
    %442 = vmatprep.subr.mxu0 0.0
    %443 = vmatpush1.msra.mxu0 0.0
    %444 = vmatprep.subr.mxu0 0.0
    %445 = vmatpush1.msra.mxu0 0.0
    %446 = vmatprep.subr.mxu0 0.0
    %447 = vmatpush1.msra.mxu0 0.0
    %448 = vmatprep.subr.mxu0 0.0
    %449 = vmatpush1.msra.mxu0 0.0
    %450 = vmatprep.subr.mxu0 0.0
    %451 = vmatpush1.msra.mxu0 0.0
    %452 = vmatprep.subr.mxu0 0.0
    %453 = vmatpush1.msra.mxu0 0.0
    %454 = vmatprep.subr.mxu0 0.0
    %455 = vmatpush1.msra.mxu0 0.0
    %456 = vmatprep.subr.mxu0 0.0
    %457 = vmatpush1.msra.mxu0 0.0
    %458 = vmatprep.subr.mxu0 0.0
    %459 = vmatpush1.msra.mxu0 0.0
    %460 = vmatprep.subr.mxu0 0.0
    %461 = vmatpush1.msra.mxu0 0.0
    %462 = vmatprep.subr.mxu0 0.0
    %463 = vmatpush1.msra.mxu0 0.0
    %464 = vmatprep.subr.mxu0 0.0
    %465 = vmatpush1.msra.mxu0 0.0
    %466 = vmatprep.subr.mxu0 0.0
    %467 = vmatpush1.msra.mxu0 0.0
    %468 = vmatprep.subr.mxu0 0.0
    %469 = vmatpush1.msra.mxu0 0.0
    %470 = vmatprep.subr.mxu0 0.0
    %471 = vmatpush1.msra.mxu0 0.0
    %472 = vmatprep.subr.mxu0 0.0
    %473 = vmatpush1.msra.mxu0 0.0
    %474 = vmatprep.subr.mxu0 0.0
    %475 = vmatpush1.msra.mxu0 0.0
    %476 = vmatprep.subr.mxu0 0.0
    %477 = vmatpush1.msra.mxu0 0.0
    %478 = vmatprep.subr.mxu0 0.0
    %479 = vmatpush1.msra.mxu0 0.0
    %480 = vmatprep.subr.mxu0 0.0
    %481 = vmatpush1.msra.mxu0 0.0
    %482 = vmatprep.mubr.f32.mxu0 0.0
    %483 = vmatmul.mubr.f32.gmra.mrb[0].mxu0 %v416
    %v484 = vpop.f32.mrb[0].mxu0
    %v485 = vadd.f32 0.0, %v484
    %v486 = vpop.f32.mrb[0].mxu0
    %487 = vdwg.mxu0
    %v489 = vsel %vm414, %v53, 0
    %491 = vmatprep.subr.mxu0 0.0
    %492 = vmatpush1.msra.mxu0 %v408
    %493 = vmatprep.subr.mxu0 0.0
    %494 = vmatpush1.msra.mxu0 %v409
    %495 = vmatprep.subr.mxu0 0.0
    %496 = vmatpush1.msra.mxu0 0.0
    %497 = vmatprep.subr.mxu0 0.0
    %498 = vmatpush1.msra.mxu0 0.0
    %499 = vmatprep.subr.mxu0 0.0
    %500 = vmatpush1.msra.mxu0 0.0
    %501 = vmatprep.subr.mxu0 0.0
    %502 = vmatpush1.msra.mxu0 0.0
    %503 = vmatprep.subr.mxu0 0.0
    %504 = vmatpush1.msra.mxu0 0.0
    %505 = vmatprep.subr.mxu0 0.0
    %506 = vmatpush1.msra.mxu0 0.0
    %507 = vmatprep.subr.mxu0 0.0
    %508 = vmatpush1.msra.mxu0 0.0
    %509 = vmatprep.subr.mxu0 0.0
    %510 = vmatpush1.msra.mxu0 0.0
    %511 = vmatprep.subr.mxu0 0.0
    %512 = vmatpush1.msra.mxu0 0.0
    %513 = vmatprep.subr.mxu0 0.0
    %514 = vmatpush1.msra.mxu0 0.0
    %515 = vmatprep.subr.mxu0 0.0
    %516 = vmatpush1.msra.mxu0 0.0
    %517 = vmatprep.subr.mxu0 0.0
    %518 = vmatpush1.msra.mxu0 0.0
    %519 = vmatprep.subr.mxu0 0.0
    %520 = vmatpush1.msra.mxu0 0.0
    %521 = vmatprep.subr.mxu0 0.0
    %522 = vmatpush1.msra.mxu0 0.0
    %523 = vmatprep.subr.mxu0 0.0
    %524 = vmatpush1.msra.mxu0 0.0
    %525 = vmatprep.subr.mxu0 0.0
    %526 = vmatpush1.msra.mxu0 0.0
    %527 = vmatprep.subr.mxu0 0.0
    %528 = vmatpush1.msra.mxu0 0.0
    %529 = vmatprep.subr.mxu0 0.0
    %530 = vmatpush1.msra.mxu0 0.0
    %531 = vmatprep.subr.mxu0 0.0
    %532 = vmatpush1.msra.mxu0 0.0
    %533 = vmatprep.subr.mxu0 0.0
    %534 = vmatpush1.msra.mxu0 0.0
    %535 = vmatprep.subr.mxu0 0.0
    %536 = vmatpush1.msra.mxu0 0.0
    %537 = vmatprep.subr.mxu0 0.0
    %538 = vmatpush1.msra.mxu0 0.0
    %539 = vmatprep.subr.mxu0 0.0
    %540 = vmatpush1.msra.mxu0 0.0
    %541 = vmatprep.subr.mxu0 0.0
    %542 = vmatpush1.msra.mxu0 0.0
    %543 = vmatprep.subr.mxu0 0.0
    %544 = vmatpush1.msra.mxu0 0.0
    %545 = vmatprep.subr.mxu0 0.0
    %546 = vmatpush1.msra.mxu0 0.0
    %547 = vmatprep.subr.mxu0 0.0
    %548 = vmatpush1.msra.mxu0 0.0
    %549 = vmatprep.subr.mxu0 0.0
    %550 = vmatpush1.msra.mxu0 0.0
    %551 = vmatprep.subr.mxu0 0.0
    %552 = vmatpush1.msra.mxu0 0.0
    %553 = vmatprep.subr.mxu0 0.0
    %554 = vmatpush1.msra.mxu0 0.0
    %555 = vmatprep.mubr.f32.mxu0 0.0
    %556 = vmatmul.mubr.f32.gmra.mrb[0].mxu0 %v489
    %v557 = vpop.f32.mrb[0].mxu0
    %v558 = vadd.f32 0.0, %v557
    %v559 = vpop.f32.mrb[0].mxu0
    %560 = vdwg.mxu0
    %v562 = vsel %vm414, %v54, 0
    %564 = vmatprep.subr.mxu0 0.0
    %565 = vmatpush1.msra.mxu0 %v410
    %566 = vmatprep.subr.mxu0 0.0
    %567 = vmatpush1.msra.mxu0 %v411
    %568 = vmatprep.subr.mxu0 0.0
    %569 = vmatpush1.msra.mxu0 0.0
    %570 = vmatprep.subr.mxu0 0.0
    %571 = vmatpush1.msra.mxu0 0.0
    %572 = vmatprep.subr.mxu0 0.0
    %573 = vmatpush1.msra.mxu0 0.0
    %574 = vmatprep.subr.mxu0 0.0
    %575 = vmatpush1.msra.mxu0 0.0
    %576 = vmatprep.subr.mxu0 0.0
    %577 = vmatpush1.msra.mxu0 0.0
    %578 = vmatprep.subr.mxu0 0.0
    %579 = vmatpush1.msra.mxu0 0.0
    %580 = vmatprep.subr.mxu0 0.0
    %581 = vmatpush1.msra.mxu0 0.0
    %582 = vmatprep.subr.mxu0 0.0
    %583 = vmatpush1.msra.mxu0 0.0
    %584 = vmatprep.subr.mxu0 0.0
    %585 = vmatpush1.msra.mxu0 0.0
    %586 = vmatprep.subr.mxu0 0.0
    %587 = vmatpush1.msra.mxu0 0.0
    %588 = vmatprep.subr.mxu0 0.0
    %589 = vmatpush1.msra.mxu0 0.0
    %590 = vmatprep.subr.mxu0 0.0
    %591 = vmatpush1.msra.mxu0 0.0
    %592 = vmatprep.subr.mxu0 0.0
    %593 = vmatpush1.msra.mxu0 0.0
    %594 = vmatprep.subr.mxu0 0.0
    %595 = vmatpush1.msra.mxu0 0.0
    %596 = vmatprep.subr.mxu0 0.0
    %597 = vmatpush1.msra.mxu0 0.0
    %598 = vmatprep.subr.mxu0 0.0
    %599 = vmatpush1.msra.mxu0 0.0
    %600 = vmatprep.subr.mxu0 0.0
    %601 = vmatpush1.msra.mxu0 0.0
    %602 = vmatprep.subr.mxu0 0.0
    %603 = vmatpush1.msra.mxu0 0.0
    %604 = vmatprep.subr.mxu0 0.0
    %605 = vmatpush1.msra.mxu0 0.0
    %606 = vmatprep.subr.mxu0 0.0
    %607 = vmatpush1.msra.mxu0 0.0
    %608 = vmatprep.subr.mxu0 0.0
    %609 = vmatpush1.msra.mxu0 0.0
    %610 = vmatprep.subr.mxu0 0.0
    %611 = vmatpush1.msra.mxu0 0.0
    %612 = vmatprep.subr.mxu0 0.0
    %613 = vmatpush1.msra.mxu0 0.0
    %614 = vmatprep.subr.mxu0 0.0
    %615 = vmatpush1.msra.mxu0 0.0
    %616 = vmatprep.subr.mxu0 0.0
    %617 = vmatpush1.msra.mxu0 0.0
    %618 = vmatprep.subr.mxu0 0.0
    %619 = vmatpush1.msra.mxu0 0.0
    %620 = vmatprep.subr.mxu0 0.0
    %621 = vmatpush1.msra.mxu0 0.0
    %622 = vmatprep.subr.mxu0 0.0
    %623 = vmatpush1.msra.mxu0 0.0
    %624 = vmatprep.subr.mxu0 0.0
    %625 = vmatpush1.msra.mxu0 0.0
    %626 = vmatprep.subr.mxu0 0.0
    %627 = vmatpush1.msra.mxu0 0.0
    %628 = vmatprep.mubr.f32.mxu0 0.0
    %629 = vmatmul.mubr.f32.gmra.mrb[0].mxu0 %v562
    %v630 = vpop.f32.mrb[0].mxu0
    %v631 = vadd.f32 0.0, %v630
    %v632 = vpop.f32.mrb[0].mxu0
    %633 = vdwg.mxu0
    %v635 = vsel %vm414, %v55, 0
    %637 = vmatprep.subr.mxu0 0.0
    %638 = vmatpush1.msra.mxu0 %v412
    %639 = vmatprep.subr.mxu0 0.0
    %640 = vmatpush1.msra.mxu0 %v413
    %641 = vmatprep.subr.mxu0 0.0
    %642 = vmatpush1.msra.mxu0 0.0
    %643 = vmatprep.subr.mxu0 0.0
    %644 = vmatpush1.msra.mxu0 0.0
    %645 = vmatprep.subr.mxu0 0.0
    %646 = vmatpush1.msra.mxu0 0.0
    %647 = vmatprep.subr.mxu0 0.0
    %648 = vmatpush1.msra.mxu0 0.0
    %649 = vmatprep.subr.mxu0 0.0
    %650 = vmatpush1.msra.mxu0 0.0
    %651 = vmatprep.subr.mxu0 0.0
    %652 = vmatpush1.msra.mxu0 0.0
    %653 = vmatprep.subr.mxu0 0.0
    %654 = vmatpush1.msra.mxu0 0.0
    %655 = vmatprep.subr.mxu0 0.0
    %656 = vmatpush1.msra.mxu0 0.0
    %657 = vmatprep.subr.mxu0 0.0
    %658 = vmatpush1.msra.mxu0 0.0
    %659 = vmatprep.subr.mxu0 0.0
    %660 = vmatpush1.msra.mxu0 0.0
    %661 = vmatprep.subr.mxu0 0.0
    %662 = vmatpush1.msra.mxu0 0.0
    %663 = vmatprep.subr.mxu0 0.0
    %664 = vmatpush1.msra.mxu0 0.0
    %665 = vmatprep.subr.mxu0 0.0
    %666 = vmatpush1.msra.mxu0 0.0
    %667 = vmatprep.subr.mxu0 0.0
    %668 = vmatpush1.msra.mxu0 0.0
    %669 = vmatprep.subr.mxu0 0.0
    %670 = vmatpush1.msra.mxu0 0.0
    %671 = vmatprep.subr.mxu0 0.0
    %672 = vmatpush1.msra.mxu0 0.0
    %673 = vmatprep.subr.mxu0 0.0
    %674 = vmatpush1.msra.mxu0 0.0
    %675 = vmatprep.subr.mxu0 0.0
    %676 = vmatpush1.msra.mxu0 0.0
    %677 = vmatprep.subr.mxu0 0.0
    %678 = vmatpush1.msra.mxu0 0.0
    %679 = vmatprep.subr.mxu0 0.0
    %680 = vmatpush1.msra.mxu0 0.0
    %681 = vmatprep.subr.mxu0 0.0
    %682 = vmatpush1.msra.mxu0 0.0
    %683 = vmatprep.subr.mxu0 0.0
    %684 = vmatpush1.msra.mxu0 0.0
    %685 = vmatprep.subr.mxu0 0.0
    %686 = vmatpush1.msra.mxu0 0.0
    %687 = vmatprep.subr.mxu0 0.0
    %688 = vmatpush1.msra.mxu0 0.0
    %689 = vmatprep.subr.mxu0 0.0
    %690 = vmatpush1.msra.mxu0 0.0
    %691 = vmatprep.subr.mxu0 0.0
    %692 = vmatpush1.msra.mxu0 0.0
    %693 = vmatprep.subr.mxu0 0.0
    %694 = vmatpush1.msra.mxu0 0.0
    %695 = vmatprep.subr.mxu0 0.0
    %696 = vmatpush1.msra.mxu0 0.0
    %697 = vmatprep.subr.mxu0 0.0
    %698 = vmatpush1.msra.mxu0 0.0
    %699 = vmatprep.subr.mxu0 0.0
    %700 = vmatpush1.msra.mxu0 0.0
    %701 = vmatprep.mubr.f32.mxu0 0.0
    %702 = vmatmul.mubr.f32.gmra.mrb[0].mxu0 %v635
    %v703 = vpop.f32.mrb[0].mxu0
    %v704 = vadd.f32 0.0, %v703
    %v705 = vpop.f32.mrb[0].mxu0
    %706 = vdwg.mxu0
    %v707 = vmul.f32 %v485, 0.5
    %v708 = vmul.f32 %v558, 0.5
    %v709 = vmul.f32 %v631, 0.5
    %v710 = vmul.f32 %v704, 0.5
    %v711 = vadd.f32 %v707, %v43
    %v712 = vadd.f32 %v708, %v44
    %v713 = vadd.f32 %v709, %v45
    %v714 = vadd.f32 %v710, %v46
    %v715 = vtanh.pop %v711
    %v716 = vtanh.pop %v712
    %v717 = vtanh.pop %v713
    %v718 = vtanh.pop %v714
    %vm719 = vcmask 122880
    %720 = vst.msk [vmem:[#allocation7] sm:$0x1] %vm719, %v715
    %721 = vst.msk [vmem:[#allocation7 + $0x1] sm:$0x1] %vm719, %v716
    %722 = vst.msk [vmem:[#allocation7 + $0x2] sm:$0x1] %vm719, %v717
    %723 = vst.msk [vmem:[#allocation7 + $0x3] sm:$0x1] %vm719, %v718
    %v724 = vstv %s60
    %725 = vst [vmem:[#allocation8] sm:$0x1] %v724
    // Predicated region
    $region25: #{tpu_custom_call.1} parent=1 // pred_check
      _
    $region26: #{tpu_custom_call.1} parent=1 // pred_check_branch
      %727 = sbr.rel (0) target = $region28
    $region27: #{tpu_custom_call.1} parent=1 // pred_region
      %s729 = ssub.s32 64, 64
      %730 = vsyncadd [#allocation4], %s729
      %s731 = sshll.u32 [#allocation7], 4
      %s732 = int_to_ptr.vmem [resolvable:$true] %s731
      %737 = dma.vmem_to_hbm [thread:$0]  %s732, 64, %s2, [#allocation4], 16, 16, 1
    $region28: #{tpu_custom_call.1} parent=1 // pred_fallthru
      _
    // Predicated region
    $region29: #{tpu_custom_call.1} parent=1 // pred_check
      _
    $region30: #{tpu_custom_call.1} parent=1 // pred_check_branch
      %739 = sbr.rel (0) target = $region32
    $region31: #{tpu_custom_call.1} parent=1 // pred_region
      %s741 = ssub.s32 16, 16
      %742 = vsyncadd [#allocation9], %s741
      %s744 = sshll.u32 [#allocation8], 4
      %s745 = int_to_ptr.vmem [resolvable:$true] %s744
      %747 = dma.vmem_to_hbm [thread:$0]  %s745, 16, %s3, [#allocation9]
    $region32: #{tpu_custom_call.1} parent=1 // pred_fallthru
      _
    // Predicated region
    $region33: #{tpu_custom_call.1} parent=1 // pred_check
      _
    $region34: #{tpu_custom_call.1} parent=1 // pred_check_branch
      %749 = sbr.rel (0) target = $region36
    $region35: #{tpu_custom_call.1} parent=1 // pred_region
      %750 = dma.done [#allocation4], 64
    $region36: #{tpu_custom_call.1} parent=1 // pred_fallthru
      _
    // Predicated region
    $region37: #{tpu_custom_call.1} parent=1 // pred_check
      _
    $region38: #{tpu_custom_call.1} parent=1 // pred_check_branch
      %752 = sbr.rel (0) target = $region40
    $region39: #{tpu_custom_call.1} parent=1 // pred_region
      %753 = dma.done [#allocation9], 16
    $region40: #{tpu_custom_call.1} parent=1 // pred_fallthru
      _
    %754 = vsyncpa [#allocation3], 1
    %755 = vsyncpa [#allocation6], 1
    %756 = vsyncpa [#allocation4], 1
    %757 = vsyncpa [#allocation9], 1

</llo_original>
